<compile_context>
chip_gen: v7x
topology: tpu7x:2x2x1
jax: 0.10.0
libtpu: 0.0.40
codegen_flags: <defaults>
</compile_context>

<pallas_src>
import jax
import jax.numpy as jnp
from jax.experimental import pallas as pl
from jax.experimental.pallas import tpu as pltpu


def _round_up(n, m):
    return ((n + m - 1) // m) * m


def _pad2(a, rows, cols):
    """Zero-pad a 2-D array up to (rows, cols)."""
    return jnp.zeros((rows, cols), a.dtype).at[: a.shape[0], : a.shape[1]].set(a)


def mlp_kernel(x_ref, w1_ref, b1_ref, w2_ref, b2_ref, w3_ref, b3_ref,
               w4_ref, b4_ref, o_ref):
    # x_ref: (TM, K) f32 tile; w*/b* are lane-padded and VMEM-resident.
    h = jnp.dot(x_ref[...], w1_ref[...], preferred_element_type=jnp.float32) + b1_ref[...]
    h = jnp.dot(h, w2_ref[...], preferred_element_type=jnp.float32) + b2_ref[...]
    h = jnp.dot(h, w3_ref[...], preferred_element_type=jnp.float32) + b3_ref[...]
    h = jnp.dot(h, w4_ref[...], preferred_element_type=jnp.float32) + b4_ref[...]
    o_ref[...] = h.astype(o_ref.dtype)


def mlp_forward(x, params, *, tm_max=512):
    """x: (batch, H, W) [or anything flattening to image_size**2 per row].
    params: ((W1,b1),...,(W4,b4)) with W stored transposed as (in, out),
    b as (1, out).  Returns (batch, num_classes) float32."""
    (w1, b1), (w2, b2), (w3, b3), (w4, b4) = params
    batch = x.shape[0]
    x2d = x.reshape(batch, -1).astype(jnp.float32)   # torch.reshape(x, (-1, D*D))
    in_dim = x2d.shape[1]
    hidden = w1.shape[1]
    num_classes = w4.shape[1]

    # Lane-dense intermediates / output: pad hidden & class dims to 128.
    h_pad = _round_up(hidden, 128)
    c_pad = _round_up(num_classes, 128)

    w1p, b1p = _pad2(w1, in_dim, h_pad), _pad2(b1, 1, h_pad)
    w2p, b2p = _pad2(w2, h_pad, h_pad), _pad2(b2, 1, h_pad)
    w3p, b3p = _pad2(w3, h_pad, h_pad), _pad2(b3, 1, h_pad)
    w4p, b4p = _pad2(w4, h_pad, c_pad), _pad2(b4, 1, c_pad)

    # Batch tiling: balance rows across grid steps, tile multiple of 8.
    num_tiles = pl.cdiv(batch, tm_max)
    tm = _round_up(pl.cdiv(batch, num_tiles), 8)
    b_padded = num_tiles * tm
    if b_padded != batch:
        x2d = jnp.pad(x2d, ((0, b_padded - batch), (0, 0)))

    out = pl.pallas_call(
        mlp_kernel,
        out_shape=jax.ShapeDtypeStruct((b_padded, c_pad), jnp.float32),
        grid_spec=pltpu.PrefetchScalarGridSpec(
            num_scalar_prefetch=0,
            grid=(num_tiles,),
            in_specs=[
                pl.BlockSpec((tm, in_dim), lambda i: (i, 0)),      # x tile (pipelined)
                pl.BlockSpec((in_dim, h_pad), lambda i: (0, 0)),   # W1 (resident)
                pl.BlockSpec((1, h_pad), lambda i: (0, 0)),        # b1
                pl.BlockSpec((h_pad, h_pad), lambda i: (0, 0)),    # W2
                pl.BlockSpec((1, h_pad), lambda i: (0, 0)),        # b2
                pl.BlockSpec((h_pad, h_pad), lambda i: (0, 0)),    # W3
                pl.BlockSpec((1, h_pad), lambda i: (0, 0)),        # b3
                pl.BlockSpec((h_pad, c_pad), lambda i: (0, 0)),    # W4
                pl.BlockSpec((1, c_pad), lambda i: (0, 0)),        # b4
            ],
            out_specs=pl.BlockSpec((tm, c_pad), lambda i: (i, 0)),
        ),
        compiler_params=pltpu.CompilerParams(
            dimension_semantics=("parallel",),   # megacore / v7x 2-TC sharding
        ),
    )(x2d, w1p, b1p, w2p, b2p, w3p, b3p, w4p, b4p)

    return out[:batch, :num_classes]


def init_linear(key, in_features, out_features):
    """Deterministic nn.Linear-style init; weight stored transposed (in, out)."""
    kw, kb = jax.random.split(key)
    bound = 1.0 / jnp.sqrt(float(in_features))
    w = jax.random.uniform(kw, (in_features, out_features), jnp.float32, -bound, bound)
    b = jax.random.uniform(kb, (1, out_features), jnp.float32, -bound, bound)
    return w, b


def ref_forward(x, params):
    """Pure-JAX f32 reference of the original 4-layer forward."""
    h = x.reshape(x.shape[0], -1)
    for w, b in params:
        h = h @ w + b
    return h


if __name__ == "__main__":
    # Small shapes consistent with the module spec.
    image_size = 16
    hidden_size = 32
    num_classes = 10
    batch_size = 8

    key = jax.random.PRNGKey(0)
    k_x, k1, k2, k3, k4 = jax.random.split(key, 5)

    x = jax.random.normal(k_x, (batch_size, image_size, image_size), jnp.float32)
    params = (
        init_linear(k1, image_size * image_size, hidden_size),
        init_linear(k2, hidden_size, hidden_size),
        init_linear(k3, hidden_size, hidden_size),
        init_linear(k4, hidden_size, num_classes),
    )

    # Aligned small batch (single grid step).
    out = jax.block_until_ready(mlp_forward(x, params))
    assert out.shape == (batch_size, num_classes)
    ref = ref_forward(x, params)
    assert jnp.allclose(out, ref, atol=1e-2, rtol=1e-2), \
        float(jnp.max(jnp.abs(out - ref)))

    # Non-multiple-of-8 batch to exercise batch padding + output slicing.
    x_odd = jax.random.normal(jax.random.PRNGKey(1),
                              (20, image_size, image_size), jnp.float32)
    out_odd = jax.block_until_ready(mlp_forward(x_odd, params))
    ref_odd = ref_forward(x_odd, params)
    assert out_odd.shape == (20, num_classes)
    assert jnp.allclose(out_odd, ref_odd, atol=1e-2, rtol=1e-2), \
        float(jnp.max(jnp.abs(out_odd - ref_odd)))

    print("KERNEL_OK")
</pallas_src>

<mosaic_0001>
module attributes {stable_mosaic.version = 11 : i64} {
  func.func @mlp_kernel(%arg0: i32, %arg1: memref<8x256xf32, #tpu.memory_space<vmem>>, %arg2: memref<256x128xf32, #tpu.memory_space<vmem>>, %arg3: memref<1x128xf32, #tpu.memory_space<vmem>>, %arg4: memref<128x128xf32, #tpu.memory_space<vmem>>, %arg5: memref<1x128xf32, #tpu.memory_space<vmem>>, %arg6: memref<128x128xf32, #tpu.memory_space<vmem>>, %arg7: memref<1x128xf32, #tpu.memory_space<vmem>>, %arg8: memref<128x128xf32, #tpu.memory_space<vmem>>, %arg9: memref<1x128xf32, #tpu.memory_space<vmem>>, %arg10: memref<8x128xf32, #tpu.memory_space<vmem>>) attributes {dimension_semantics = [#tpu.dimension_semantics<parallel>], iteration_bounds = array<i64: 1>, scalar_prefetch = 0 : i64, scratch_operands = 0 : i64, tpu.core_type = #tpu.core_type<tc>, window_params = [{transform_indices = @transform_0, window_bounds = array<i64: 8, 256>}, {pipeline_mode = #tpu.pipeline_mode<synchronous>, transform_indices = @transform_1, window_bounds = array<i64: 256, 128>}, {pipeline_mode = #tpu.pipeline_mode<synchronous>, transform_indices = @transform_2, window_bounds = array<i64: 1, 128>}, {pipeline_mode = #tpu.pipeline_mode<synchronous>, transform_indices = @transform_3, window_bounds = array<i64: 128, 128>}, {pipeline_mode = #tpu.pipeline_mode<synchronous>, transform_indices = @transform_4, window_bounds = array<i64: 1, 128>}, {pipeline_mode = #tpu.pipeline_mode<synchronous>, transform_indices = @transform_5, window_bounds = array<i64: 128, 128>}, {pipeline_mode = #tpu.pipeline_mode<synchronous>, transform_indices = @transform_6, window_bounds = array<i64: 1, 128>}, {pipeline_mode = #tpu.pipeline_mode<synchronous>, transform_indices = @transform_7, window_bounds = array<i64: 128, 128>}, {pipeline_mode = #tpu.pipeline_mode<synchronous>, transform_indices = @transform_8, window_bounds = array<i64: 1, 128>}, {transform_indices = @transform_9, window_bounds = array<i64: 8, 128>}]} {
    %c0 = arith.constant 0 : index
    %c0_0 = arith.constant 0 : index
    %0 = vector.load %arg1[%c0, %c0_0] : memref<8x256xf32, #tpu.memory_space<vmem>>, vector<8x256xf32>
    %c0_1 = arith.constant 0 : index
    %c0_2 = arith.constant 0 : index
    %1 = vector.load %arg2[%c0_1, %c0_2] : memref<256x128xf32, #tpu.memory_space<vmem>>, vector<256x128xf32>
    %cst = arith.constant dense<0.000000e+00> : vector<8x128xf32>
    %2 = tpu.matmul %0, %1, %cst {dimension_numbers = #tpu.dot_dimension_numbers<[1], [0], [0], [1], [0, 0, 1, 1], [], []>} : vector<8x256xf32>, vector<256x128xf32>, vector<8x128xf32> -> vector<8x128xf32>
    %c0_3 = arith.constant 0 : index
    %c0_4 = arith.constant 0 : index
    %3 = vector.load %arg3[%c0_3, %c0_4] : memref<1x128xf32, #tpu.memory_space<vmem>>, vector<1x128xf32>
    %4 = vector.broadcast %3 : vector<1x128xf32> to vector<8x128xf32>
    %5 = arith.addf %2, %4 : vector<8x128xf32>
    %c0_5 = arith.constant 0 : index
    %c0_6 = arith.constant 0 : index
    %6 = vector.load %arg4[%c0_5, %c0_6] : memref<128x128xf32, #tpu.memory_space<vmem>>, vector<128x128xf32>
    %cst_7 = arith.constant dense<0.000000e+00> : vector<8x128xf32>
    %7 = tpu.matmul %5, %6, %cst_7 {dimension_numbers = #tpu.dot_dimension_numbers<[1], [0], [0], [1], [0, 0, 1, 1], [], []>} : vector<8x128xf32>, vector<128x128xf32>, vector<8x128xf32> -> vector<8x128xf32>
    %c0_8 = arith.constant 0 : index
    %c0_9 = arith.constant 0 : index
    %8 = vector.load %arg5[%c0_8, %c0_9] : memref<1x128xf32, #tpu.memory_space<vmem>>, vector<1x128xf32>
    %9 = vector.broadcast %8 : vector<1x128xf32> to vector<8x128xf32>
    %10 = arith.addf %7, %9 : vector<8x128xf32>
    %c0_10 = arith.constant 0 : index
    %c0_11 = arith.constant 0 : index
    %11 = vector.load %arg6[%c0_10, %c0_11] : memref<128x128xf32, #tpu.memory_space<vmem>>, vector<128x128xf32>
    %cst_12 = arith.constant dense<0.000000e+00> : vector<8x128xf32>
    %12 = tpu.matmul %10, %11, %cst_12 {dimension_numbers = #tpu.dot_dimension_numbers<[1], [0], [0], [1], [0, 0, 1, 1], [], []>} : vector<8x128xf32>, vector<128x128xf32>, vector<8x128xf32> -> vector<8x128xf32>
    %c0_13 = arith.constant 0 : index
    %c0_14 = arith.constant 0 : index
    %13 = vector.load %arg7[%c0_13, %c0_14] : memref<1x128xf32, #tpu.memory_space<vmem>>, vector<1x128xf32>
    %14 = vector.broadcast %13 : vector<1x128xf32> to vector<8x128xf32>
    %15 = arith.addf %12, %14 : vector<8x128xf32>
    %c0_15 = arith.constant 0 : index
    %c0_16 = arith.constant 0 : index
    %16 = vector.load %arg8[%c0_15, %c0_16] : memref<128x128xf32, #tpu.memory_space<vmem>>, vector<128x128xf32>
    %cst_17 = arith.constant dense<0.000000e+00> : vector<8x128xf32>
    %17 = tpu.matmul %15, %16, %cst_17 {dimension_numbers = #tpu.dot_dimension_numbers<[1], [0], [0], [1], [0, 0, 1, 1], [], []>} : vector<8x128xf32>, vector<128x128xf32>, vector<8x128xf32> -> vector<8x128xf32>
    %c0_18 = arith.constant 0 : index
    %c0_19 = arith.constant 0 : index
    %18 = vector.load %arg9[%c0_18, %c0_19] : memref<1x128xf32, #tpu.memory_space<vmem>>, vector<1x128xf32>
    %19 = vector.broadcast %18 : vector<1x128xf32> to vector<8x128xf32>
    %20 = arith.addf %17, %19 : vector<8x128xf32>
    %c0_20 = arith.constant 0 : index
    %c0_21 = arith.constant 0 : index
    %21 = vector.load %arg10[%c0_20, %c0_21] : memref<8x128xf32, #tpu.memory_space<vmem>>, vector<8x128xf32>
    tpu.vector_store %arg10[%c0_20, %c0_21], %20 {strides = array<i32>} : memref<8x128xf32, #tpu.memory_space<vmem>>, vector<8x128xf32>,
    return
  }
  func.func @transform_0(%arg0: i32) -> (i32, i32) {
    %c0_i32 = arith.constant 0 : i32
    %c0_i32_0 = arith.constant 0 : i32
    return %arg0, %c0_i32 : i32, i32
  }
  func.func @transform_1(%arg0: i32) -> (i32, i32) {
    %c0_i32 = arith.constant 0 : i32
    %c0_i32_0 = arith.constant 0 : i32
    %c0_i32_1 = arith.constant 0 : i32
    return %c0_i32, %c0_i32_0 : i32, i32
  }
  func.func @transform_2(%arg0: i32) -> (i32, i32) {
    %c0_i32 = arith.constant 0 : i32
    %c0_i32_0 = arith.constant 0 : i32
    %c0_i32_1 = arith.constant 0 : i32
    return %c0_i32, %c0_i32_0 : i32, i32
  }
  func.func @transform_3(%arg0: i32) -> (i32, i32) {
    %c0_i32 = arith.constant 0 : i32
    %c0_i32_0 = arith.constant 0 : i32
    %c0_i32_1 = arith.constant 0 : i32
    return %c0_i32, %c0_i32_0 : i32, i32
  }
  func.func @transform_4(%arg0: i32) -> (i32, i32) {
    %c0_i32 = arith.constant 0 : i32
    %c0_i32_0 = arith.constant 0 : i32
    %c0_i32_1 = arith.constant 0 : i32
    return %c0_i32, %c0_i32_0 : i32, i32
  }
  func.func @transform_5(%arg0: i32) -> (i32, i32) {
    %c0_i32 = arith.constant 0 : i32
    %c0_i32_0 = arith.constant 0 : i32
    %c0_i32_1 = arith.constant 0 : i32
    return %c0_i32, %c0_i32_0 : i32, i32
  }
  func.func @transform_6(%arg0: i32) -> (i32, i32) {
    %c0_i32 = arith.constant 0 : i32
    %c0_i32_0 = arith.constant 0 : i32
    %c0_i32_1 = arith.constant 0 : i32
    return %c0_i32, %c0_i32_0 : i32, i32
  }
  func.func @transform_7(%arg0: i32) -> (i32, i32) {
    %c0_i32 = arith.constant 0 : i32
    %c0_i32_0 = arith.constant 0 : i32
    %c0_i32_1 = arith.constant 0 : i32
    return %c0_i32, %c0_i32_0 : i32, i32
  }
  func.func @transform_8(%arg0: i32) -> (i32, i32) {
    %c0_i32 = arith.constant 0 : i32
    %c0_i32_0 = arith.constant 0 : i32
    %c0_i32_1 = arith.constant 0 : i32
    return %c0_i32, %c0_i32_0 : i32, i32
  }
  func.func @transform_9(%arg0: i32) -> (i32, i32) {
    %c0_i32 = arith.constant 0 : i32
    %c0_i32_0 = arith.constant 0 : i32
    return %arg0, %c0_i32 : i32, i32
  }
}

</mosaic_0001>

<llo_original>
// kernel: tpu_custom_call.1
$region0: #{tpu_custom_call.1}
  #allocation0 [shape = 'u32[]', space=smem, size = 0x4, offset = 0x4, fixed_abs, tag = 'smem constant byte address 0x4 - core index']
  #allocation1 [shape = 'u32[144,128]{1,0:T(1,128)}', space=vmem, size = 0x12000, scoped, tag = 'internal scratch']
  %s0 = inlined_call_operand.hbm [shape: f32[8,256], index: 0, kind: input, shape index: {}]
  %s1 = inlined_call_operand.hbm [shape: f32[256,128], index: 1, kind: input, shape index: {}]
  %s2 = inlined_call_operand.vmem [shape: f32[1,128], index: 2, kind: input, shape index: {}]
  %s3 = inlined_call_operand.hbm [shape: f32[128,128], index: 3, kind: input, shape index: {}]
  %s4 = inlined_call_operand.vmem [shape: f32[1,128], index: 4, kind: input, shape index: {}]
  %s5 = inlined_call_operand.hbm [shape: f32[128,128], index: 5, kind: input, shape index: {}]
  %s6 = inlined_call_operand.vmem [shape: f32[1,128], index: 6, kind: input, shape index: {}]
  %s7 = inlined_call_operand.hbm [shape: f32[128,128], index: 7, kind: input, shape index: {}]
  %s8 = inlined_call_operand.vmem [shape: f32[1,128], index: 8, kind: input, shape index: {}]
  %s9 = inlined_call_operand.hbm [shape: f32[8,128], index: 9, kind: output, shape index: {}]
  %s10 = sld [smem:[#allocation0]]
  $region66: #{tpu_custom_call.1} parent=0
    _
  %s12 = ssub.s32 1, %s10
  %s13 = scalar_select 0, %s12, %s10
  $region1: #{tpu_custom_call.1} parent=0
    #allocation2 [shape = 'u8[8192]{0}', space=vmem, size = 0x2000, scoped, tag = 'input window, operand 0, single buffered']
    #allocation3 [shape = 's32[1]{0}', space=sflag, size = 0x4, scoped, tag = 'scoped memory for tpu_custom_call.1']
    #allocation4 [shape = 's32[1]{0}', space=sflag, size = 0x4, scoped, tag = 'scoped memory for tpu_custom_call.1']
    #allocation5 [shape = 'u8[131072]{0}', space=vmem, size = 0x20000, scoped, tag = 'input window, operand 1, single buffered']
    #allocation6 [shape = 's32[1]{0}', space=sflag, size = 0x4, scoped, tag = 'scoped memory for tpu_custom_call.1']
    #allocation7 [shape = 'u8[65536]{0}', space=vmem, size = 0x10000, scoped, tag = 'input window, operand 3, single buffered']
    #allocation8 [shape = 'u8[65536]{0}', space=vmem, size = 0x10000, scoped, tag = 'input window, operand 5, single buffered']
    #allocation9 [shape = 's32[1]{0}', space=sflag, size = 0x4, scoped, tag = 'scoped memory for tpu_custom_call.1']
    #allocation10 [shape = 'u8[65536]{0}', space=vmem, size = 0x10000, scoped, tag = 'input window, operand 7, single buffered']
    #allocation11 [shape = 'u8[4096]{0}', space=vmem, size = 0x1000, scoped, tag = 'output window, operand 0, single buffered']
    %14 = vsyncpa [#allocation3], 0
    %15 = vsyncpa [#allocation6], 0
    %16 = vsyncpa [#allocation9], 0
    %17 = vsyncpa [#allocation4], 0
    // Predicated region
    $region2: #{tpu_custom_call.1} parent=1 // pred_check
      _
    $region3: #{tpu_custom_call.1} parent=1 // pred_check_branch
      %19 = sbr.rel (0) target = $region5
    $region4: #{tpu_custom_call.1} parent=1 // pred_region
      %s21 = ssub.s32 256, 256
      %22 = vsyncadd [#allocation3], %s21
      %s24 = sshll.u32 [#allocation2], 4
      %s25 = int_to_ptr.vmem [resolvable:$true] %s24
      %27 = dma.hbm_to_vmem [thread:$0]  %s0, 256, %s25, [#allocation3]
    $region5: #{tpu_custom_call.1} parent=1 // pred_fallthru
      _
    // Predicated region
    $region6: #{tpu_custom_call.1} parent=1 // pred_check
      _
    $region7: #{tpu_custom_call.1} parent=1 // pred_check_branch
      %29 = sbr.rel (0) target = $region9
    $region8: #{tpu_custom_call.1} parent=1 // pred_region
      %s31 = ssub.s32 4096, 4096
      %32 = vsyncadd [#allocation6], %s31
      %s33 = sshll.u32 [#allocation5], 4
      %s34 = int_to_ptr.vmem [resolvable:$true] %s33
      %39 = dma.hbm_to_vmem [thread:$0]  %s1, 4096, %s34, [#allocation6], 128, 128, 8
    $region9: #{tpu_custom_call.1} parent=1 // pred_fallthru
      _
    // Predicated region
    $region10: #{tpu_custom_call.1} parent=1 // pred_check
      _
    $region11: #{tpu_custom_call.1} parent=1 // pred_check_branch
      %41 = sbr.rel (0) target = $region13
    $region12: #{tpu_custom_call.1} parent=1 // pred_region
      _
    $region13: #{tpu_custom_call.1} parent=1 // pred_fallthru
      _
    // Predicated region
    $region14: #{tpu_custom_call.1} parent=1 // pred_check
      _
    $region15: #{tpu_custom_call.1} parent=1 // pred_check_branch
      %43 = sbr.rel (0) target = $region17
    $region16: #{tpu_custom_call.1} parent=1 // pred_region
      %s45 = ssub.s32 2048, 2048
      %46 = vsyncadd [#allocation6], %s45
      %s47 = sshll.u32 [#allocation7], 4
      %s48 = int_to_ptr.vmem [resolvable:$true] %s47
      %53 = dma.hbm_to_vmem [thread:$0]  %s3, 2048, %s48, [#allocation6], 128, 128, 8
    $region17: #{tpu_custom_call.1} parent=1 // pred_fallthru
      _
    // Predicated region
    $region18: #{tpu_custom_call.1} parent=1 // pred_check
      _
    $region19: #{tpu_custom_call.1} parent=1 // pred_check_branch
      %55 = sbr.rel (0) target = $region21
    $region20: #{tpu_custom_call.1} parent=1 // pred_region
      _
    $region21: #{tpu_custom_call.1} parent=1 // pred_fallthru
      _
    // Predicated region
    $region22: #{tpu_custom_call.1} parent=1 // pred_check
      _
    $region23: #{tpu_custom_call.1} parent=1 // pred_check_branch
      %57 = sbr.rel (0) target = $region25
    $region24: #{tpu_custom_call.1} parent=1 // pred_region
      %s59 = ssub.s32 2048, 2048
      %60 = vsyncadd [#allocation9], %s59
      %s61 = sshll.u32 [#allocation8], 4
      %s62 = int_to_ptr.vmem [resolvable:$true] %s61
      %67 = dma.hbm_to_vmem [thread:$0]  %s5, 2048, %s62, [#allocation9], 128, 128, 8
    $region25: #{tpu_custom_call.1} parent=1 // pred_fallthru
      _
    // Predicated region
    $region26: #{tpu_custom_call.1} parent=1 // pred_check
      _
    $region27: #{tpu_custom_call.1} parent=1 // pred_check_branch
      %69 = sbr.rel (0) target = $region29
    $region28: #{tpu_custom_call.1} parent=1 // pred_region
      _
    $region29: #{tpu_custom_call.1} parent=1 // pred_fallthru
      _
    // Predicated region
    $region30: #{tpu_custom_call.1} parent=1 // pred_check
      _
    $region31: #{tpu_custom_call.1} parent=1 // pred_check_branch
      %71 = sbr.rel (0) target = $region33
    $region32: #{tpu_custom_call.1} parent=1 // pred_region
      %s73 = ssub.s32 2048, 2048
      %74 = vsyncadd [#allocation9], %s73
      %s75 = sshll.u32 [#allocation10], 4
      %s76 = int_to_ptr.vmem [resolvable:$true] %s75
      %81 = dma.hbm_to_vmem [thread:$0]  %s7, 2048, %s76, [#allocation9], 128, 128, 8
    $region33: #{tpu_custom_call.1} parent=1 // pred_fallthru
      _
    // Predicated region
    $region34: #{tpu_custom_call.1} parent=1 // pred_check
      _
    $region35: #{tpu_custom_call.1} parent=1 // pred_check_branch
      %83 = sbr.rel (0) target = $region37
    $region36: #{tpu_custom_call.1} parent=1 // pred_region
      _
    $region37: #{tpu_custom_call.1} parent=1 // pred_fallthru
      _
    // Predicated region
    $region38: #{tpu_custom_call.1} parent=1 // pred_check
      _
    $region39: #{tpu_custom_call.1} parent=1 // pred_check_branch
      %85 = sbr.rel (0) target = $region41
    $region40: #{tpu_custom_call.1} parent=1 // pred_region
      %86 = dma.done [#allocation3], 256
    $region41: #{tpu_custom_call.1} parent=1 // pred_fallthru
      _
    // Predicated region
    $region42: #{tpu_custom_call.1} parent=1 // pred_check
      _
    $region43: #{tpu_custom_call.1} parent=1 // pred_check_branch
      %88 = sbr.rel (0) target = $region45
    $region44: #{tpu_custom_call.1} parent=1 // pred_region
      %89 = dma.done [#allocation6], 4096
    $region45: #{tpu_custom_call.1} parent=1 // pred_fallthru
      _
    // Predicated region
    $region46: #{tpu_custom_call.1} parent=1 // pred_check
      _
    $region47: #{tpu_custom_call.1} parent=1 // pred_check_branch
      %91 = sbr.rel (0) target = $region49
    $region48: #{tpu_custom_call.1} parent=1 // pred_region
      %92 = dma.done [#allocation6], 2048
    $region49: #{tpu_custom_call.1} parent=1 // pred_fallthru
      _
    // Predicated region
    $region50: #{tpu_custom_call.1} parent=1 // pred_check
      _
    $region51: #{tpu_custom_call.1} parent=1 // pred_check_branch
      %94 = sbr.rel (0) target = $region53
    $region52: #{tpu_custom_call.1} parent=1 // pred_region
      %95 = dma.done [#allocation9], 2048
    $region53: #{tpu_custom_call.1} parent=1 // pred_fallthru
      _
    // Predicated region
    $region54: #{tpu_custom_call.1} parent=1 // pred_check
      _
    $region55: #{tpu_custom_call.1} parent=1 // pred_check_branch
      %97 = sbr.rel (0) target = $region57
    $region56: #{tpu_custom_call.1} parent=1 // pred_region
      %98 = dma.done [#allocation9], 2048
    $region57: #{tpu_custom_call.1} parent=1 // pred_fallthru
      _
    %v99 = vld [vmem:[#allocation2] sm:$0xff]
    %v100 = vld [vmem:[#allocation2 + $0x8] sm:$0xff]
    %v101 = vld [vmem:[#allocation5] sm:$0xff]
    %v102 = vld [vmem:[#allocation5 + $0x8] sm:$0xff]
    %v103 = vld [vmem:[#allocation5 + $0x10] sm:$0xff]
    %v104 = vld [vmem:[#allocation5 + $0x18] sm:$0xff]
    %v105 = vld [vmem:[#allocation5 + $0x20] sm:$0xff]
    %v106 = vld [vmem:[#allocation5 + $0x28] sm:$0xff]
    %v107 = vld [vmem:[#allocation5 + $0x30] sm:$0xff]
    %v108 = vld [vmem:[#allocation5 + $0x38] sm:$0xff]
    %v109 = vld [vmem:[#allocation5 + $0x40] sm:$0xff]
    %v110 = vld [vmem:[#allocation5 + $0x48] sm:$0xff]
    %v111 = vld [vmem:[#allocation5 + $0x50] sm:$0xff]
    %v112 = vld [vmem:[#allocation5 + $0x58] sm:$0xff]
    %v113 = vld [vmem:[#allocation5 + $0x60] sm:$0xff]
    %v114 = vld [vmem:[#allocation5 + $0x68] sm:$0xff]
    %v115 = vld [vmem:[#allocation5 + $0x70] sm:$0xff]
    %v116 = vld [vmem:[#allocation5 + $0x78] sm:$0xff]
    %v117 = vld [vmem:[#allocation5 + $0x80] sm:$0xff]
    %v118 = vld [vmem:[#allocation5 + $0x88] sm:$0xff]
    %v119 = vld [vmem:[#allocation5 + $0x90] sm:$0xff]
    %v120 = vld [vmem:[#allocation5 + $0x98] sm:$0xff]
    %v121 = vld [vmem:[#allocation5 + $0xa0] sm:$0xff]
    %v122 = vld [vmem:[#allocation5 + $0xa8] sm:$0xff]
    %v123 = vld [vmem:[#allocation5 + $0xb0] sm:$0xff]
    %v124 = vld [vmem:[#allocation5 + $0xb8] sm:$0xff]
    %v125 = vld [vmem:[#allocation5 + $0xc0] sm:$0xff]
    %v126 = vld [vmem:[#allocation5 + $0xc8] sm:$0xff]
    %v127 = vld [vmem:[#allocation5 + $0xd0] sm:$0xff]
    %v128 = vld [vmem:[#allocation5 + $0xd8] sm:$0xff]
    %v129 = vld [vmem:[#allocation5 + $0xe0] sm:$0xff]
    %v130 = vld [vmem:[#allocation5 + $0xe8] sm:$0xff]
    %v131 = vld [vmem:[#allocation5 + $0xf0] sm:$0xff]
    %v132 = vld [vmem:[#allocation5 + $0xf8] sm:$0xff]
    %v133 = vld [vmem:[%s2] sm:$0x1]
    %v135 = vlaneseq
    %v136 = vshrl.u32 %v135, 7
    %v137 = vsub.s32 0, %v136
    %v138 = vrot.slane %v133, %v137
    %140 = vmatprep.subr.mxu0 0.0
    %141 = vmatpush1.msra.mxu0 %v101
    %142 = vmatprep.subr.mxu0 0.0
    %143 = vmatpush1.msra.mxu0 %v102
    %144 = vmatprep.subr.mxu0 0.0
    %145 = vmatpush1.msra.mxu0 %v103
    %146 = vmatprep.subr.mxu0 0.0
    %147 = vmatpush1.msra.mxu0 %v104
    %148 = vmatprep.subr.mxu0 0.0
    %149 = vmatpush1.msra.mxu0 %v105
    %150 = vmatprep.subr.mxu0 0.0
    %151 = vmatpush1.msra.mxu0 %v106
    %152 = vmatprep.subr.mxu0 0.0
    %153 = vmatpush1.msra.mxu0 %v107
    %154 = vmatprep.subr.mxu0 0.0
    %155 = vmatpush1.msra.mxu0 %v108
    %156 = vmatprep.subr.mxu0 0.0
    %157 = vmatpush1.msra.mxu0 %v109
    %158 = vmatprep.subr.mxu0 0.0
    %159 = vmatpush1.msra.mxu0 %v110
    %160 = vmatprep.subr.mxu0 0.0
    %161 = vmatpush1.msra.mxu0 %v111
    %162 = vmatprep.subr.mxu0 0.0
    %163 = vmatpush1.msra.mxu0 %v112
    %164 = vmatprep.subr.mxu0 0.0
    %165 = vmatpush1.msra.mxu0 %v113
    %166 = vmatprep.subr.mxu0 0.0
    %167 = vmatpush1.msra.mxu0 %v114
    %168 = vmatprep.subr.mxu0 0.0
    %169 = vmatpush1.msra.mxu0 %v115
    %170 = vmatprep.subr.mxu0 0.0
    %171 = vmatpush1.msra.mxu0 %v116
    %172 = vmatprep.subr.mxu0 0.0
    %173 = vmatpush1.msra.mxu0 %v117
    %174 = vmatprep.subr.mxu0 0.0
    %175 = vmatpush1.msra.mxu0 %v118
    %176 = vmatprep.subr.mxu0 0.0
    %177 = vmatpush1.msra.mxu0 %v119
    %178 = vmatprep.subr.mxu0 0.0
    %179 = vmatpush1.msra.mxu0 %v120
    %180 = vmatprep.subr.mxu0 0.0
    %181 = vmatpush1.msra.mxu0 %v121
    %182 = vmatprep.subr.mxu0 0.0
    %183 = vmatpush1.msra.mxu0 %v122
    %184 = vmatprep.subr.mxu0 0.0
    %185 = vmatpush1.msra.mxu0 %v123
    %186 = vmatprep.subr.mxu0 0.0
    %187 = vmatpush1.msra.mxu0 %v124
    %188 = vmatprep.subr.mxu0 0.0
    %189 = vmatpush1.msra.mxu0 %v125
    %190 = vmatprep.subr.mxu0 0.0
    %191 = vmatpush1.msra.mxu0 %v126
    %192 = vmatprep.subr.mxu0 0.0
    %193 = vmatpush1.msra.mxu0 %v127
    %194 = vmatprep.subr.mxu0 0.0
    %195 = vmatpush1.msra.mxu0 %v128
    %196 = vmatprep.subr.mxu0 0.0
    %197 = vmatpush1.msra.mxu0 %v129
    %198 = vmatprep.subr.mxu0 0.0
    %199 = vmatpush1.msra.mxu0 %v130
    %200 = vmatprep.subr.mxu0 0.0
    %201 = vmatpush1.msra.mxu0 %v131
    %202 = vmatprep.subr.mxu0 0.0
    %203 = vmatpush1.msra.mxu0 %v132
    %204 = vmatprep.mubr.f32.mxu0 %v100
    %205 = vmatmul.mubr.f32.gmra.mrb[0].mxu0 %v99
    %v206 = vpop.f32.mrb[0].mxu0
    %v207 = vadd.f32 %v138, %v206
    %v208 = vpop.f32.mrb[0].mxu0
    %209 = vdwg.mxu0
    %v210 = vld [vmem:[#allocation7] sm:$0xff]
    %v211 = vld [vmem:[#allocation7 + $0x8] sm:$0xff]
    %v212 = vld [vmem:[#allocation7 + $0x10] sm:$0xff]
    %v213 = vld [vmem:[#allocation7 + $0x18] sm:$0xff]
    %v214 = vld [vmem:[#allocation7 + $0x20] sm:$0xff]
    %v215 = vld [vmem:[#allocation7 + $0x28] sm:$0xff]
    %v216 = vld [vmem:[#allocation7 + $0x30] sm:$0xff]
    %v217 = vld [vmem:[#allocation7 + $0x38] sm:$0xff]
    %v218 = vld [vmem:[#allocation7 + $0x40] sm:$0xff]
    %v219 = vld [vmem:[#allocation7 + $0x48] sm:$0xff]
    %v220 = vld [vmem:[#allocation7 + $0x50] sm:$0xff]
    %v221 = vld [vmem:[#allocation7 + $0x58] sm:$0xff]
    %v222 = vld [vmem:[#allocation7 + $0x60] sm:$0xff]
    %v223 = vld [vmem:[#allocation7 + $0x68] sm:$0xff]
    %v224 = vld [vmem:[#allocation7 + $0x70] sm:$0xff]
    %v225 = vld [vmem:[#allocation7 + $0x78] sm:$0xff]
    %v226 = vld [vmem:[%s4] sm:$0x1]
    %v228 = vlaneseq
    %v229 = vshrl.u32 %v228, 7
    %v230 = vsub.s32 0, %v229
    %v231 = vrot.slane %v226, %v230
    %233 = vmatprep.subr.mxu0 0.0
    %234 = vmatpush1.msra.mxu0 %v210
    %235 = vmatprep.subr.mxu0 0.0
    %236 = vmatpush1.msra.mxu0 %v211
    %237 = vmatprep.subr.mxu0 0.0
    %238 = vmatpush1.msra.mxu0 %v212
    %239 = vmatprep.subr.mxu0 0.0
    %240 = vmatpush1.msra.mxu0 %v213
    %241 = vmatprep.subr.mxu0 0.0
    %242 = vmatpush1.msra.mxu0 %v214
    %243 = vmatprep.subr.mxu0 0.0
    %244 = vmatpush1.msra.mxu0 %v215
    %245 = vmatprep.subr.mxu0 0.0
    %246 = vmatpush1.msra.mxu0 %v216
    %247 = vmatprep.subr.mxu0 0.0
    %248 = vmatpush1.msra.mxu0 %v217
    %249 = vmatprep.subr.mxu0 0.0
    %250 = vmatpush1.msra.mxu0 %v218
    %251 = vmatprep.subr.mxu0 0.0
    %252 = vmatpush1.msra.mxu0 %v219
    %253 = vmatprep.subr.mxu0 0.0
    %254 = vmatpush1.msra.mxu0 %v220
    %255 = vmatprep.subr.mxu0 0.0
    %256 = vmatpush1.msra.mxu0 %v221
    %257 = vmatprep.subr.mxu0 0.0
    %258 = vmatpush1.msra.mxu0 %v222
    %259 = vmatprep.subr.mxu0 0.0
    %260 = vmatpush1.msra.mxu0 %v223
    %261 = vmatprep.subr.mxu0 0.0
    %262 = vmatpush1.msra.mxu0 %v224
    %263 = vmatprep.subr.mxu0 0.0
    %264 = vmatpush1.msra.mxu0 %v225
    %265 = vmatprep.subr.mxu0 0.0
    %266 = vmatpush1.msra.mxu0 0.0
    %267 = vmatprep.subr.mxu0 0.0
    %268 = vmatpush1.msra.mxu0 0.0
    %269 = vmatprep.subr.mxu0 0.0
    %270 = vmatpush1.msra.mxu0 0.0
    %271 = vmatprep.subr.mxu0 0.0
    %272 = vmatpush1.msra.mxu0 0.0
    %273 = vmatprep.subr.mxu0 0.0
    %274 = vmatpush1.msra.mxu0 0.0
    %275 = vmatprep.subr.mxu0 0.0
    %276 = vmatpush1.msra.mxu0 0.0
    %277 = vmatprep.subr.mxu0 0.0
    %278 = vmatpush1.msra.mxu0 0.0
    %279 = vmatprep.subr.mxu0 0.0
    %280 = vmatpush1.msra.mxu0 0.0
    %281 = vmatprep.subr.mxu0 0.0
    %282 = vmatpush1.msra.mxu0 0.0
    %283 = vmatprep.subr.mxu0 0.0
    %284 = vmatpush1.msra.mxu0 0.0
    %285 = vmatprep.subr.mxu0 0.0
    %286 = vmatpush1.msra.mxu0 0.0
    %287 = vmatprep.subr.mxu0 0.0
    %288 = vmatpush1.msra.mxu0 0.0
    %289 = vmatprep.subr.mxu0 0.0
    %290 = vmatpush1.msra.mxu0 0.0
    %291 = vmatprep.subr.mxu0 0.0
    %292 = vmatpush1.msra.mxu0 0.0
    %293 = vmatprep.subr.mxu0 0.0
    %294 = vmatpush1.msra.mxu0 0.0
    %295 = vmatprep.subr.mxu0 0.0
    %296 = vmatpush1.msra.mxu0 0.0
    %297 = vmatprep.mubr.f32.mxu0 0.0
    %298 = vmatmul.mubr.f32.gmra.mrb[0].mxu0 %v207
    %v299 = vpop.f32.mrb[0].mxu0
    %v300 = vadd.f32 %v231, %v299
    %v301 = vpop.f32.mrb[0].mxu0
    %302 = vdwg.mxu0
    %v303 = vld [vmem:[#allocation8] sm:$0xff]
    %v304 = vld [vmem:[#allocation8 + $0x8] sm:$0xff]
    %v305 = vld [vmem:[#allocation8 + $0x10] sm:$0xff]
    %v306 = vld [vmem:[#allocation8 + $0x18] sm:$0xff]
    %v307 = vld [vmem:[#allocation8 + $0x20] sm:$0xff]
    %v308 = vld [vmem:[#allocation8 + $0x28] sm:$0xff]
    %v309 = vld [vmem:[#allocation8 + $0x30] sm:$0xff]
    %v310 = vld [vmem:[#allocation8 + $0x38] sm:$0xff]
    %v311 = vld [vmem:[#allocation8 + $0x40] sm:$0xff]
    %v312 = vld [vmem:[#allocation8 + $0x48] sm:$0xff]
    %v313 = vld [vmem:[#allocation8 + $0x50] sm:$0xff]
    %v314 = vld [vmem:[#allocation8 + $0x58] sm:$0xff]
    %v315 = vld [vmem:[#allocation8 + $0x60] sm:$0xff]
    %v316 = vld [vmem:[#allocation8 + $0x68] sm:$0xff]
    %v317 = vld [vmem:[#allocation8 + $0x70] sm:$0xff]
    %v318 = vld [vmem:[#allocation8 + $0x78] sm:$0xff]
    %v319 = vld [vmem:[%s6] sm:$0x1]
    %v321 = vlaneseq
    %v322 = vshrl.u32 %v321, 7
    %v323 = vsub.s32 0, %v322
    %v324 = vrot.slane %v319, %v323
    %326 = vmatprep.subr.mxu0 0.0
    %327 = vmatpush1.msra.mxu0 %v303
    %328 = vmatprep.subr.mxu0 0.0
    %329 = vmatpush1.msra.mxu0 %v304
    %330 = vmatprep.subr.mxu0 0.0
    %331 = vmatpush1.msra.mxu0 %v305
    %332 = vmatprep.subr.mxu0 0.0
    %333 = vmatpush1.msra.mxu0 %v306
    %334 = vmatprep.subr.mxu0 0.0
    %335 = vmatpush1.msra.mxu0 %v307
    %336 = vmatprep.subr.mxu0 0.0
    %337 = vmatpush1.msra.mxu0 %v308
    %338 = vmatprep.subr.mxu0 0.0
    %339 = vmatpush1.msra.mxu0 %v309
    %340 = vmatprep.subr.mxu0 0.0
    %341 = vmatpush1.msra.mxu0 %v310
    %342 = vmatprep.subr.mxu0 0.0
    %343 = vmatpush1.msra.mxu0 %v311
    %344 = vmatprep.subr.mxu0 0.0
    %345 = vmatpush1.msra.mxu0 %v312
    %346 = vmatprep.subr.mxu0 0.0
    %347 = vmatpush1.msra.mxu0 %v313
    %348 = vmatprep.subr.mxu0 0.0
    %349 = vmatpush1.msra.mxu0 %v314
    %350 = vmatprep.subr.mxu0 0.0
    %351 = vmatpush1.msra.mxu0 %v315
    %352 = vmatprep.subr.mxu0 0.0
    %353 = vmatpush1.msra.mxu0 %v316
    %354 = vmatprep.subr.mxu0 0.0
    %355 = vmatpush1.msra.mxu0 %v317
    %356 = vmatprep.subr.mxu0 0.0
    %357 = vmatpush1.msra.mxu0 %v318
    %358 = vmatprep.subr.mxu0 0.0
    %359 = vmatpush1.msra.mxu0 0.0
    %360 = vmatprep.subr.mxu0 0.0
    %361 = vmatpush1.msra.mxu0 0.0
    %362 = vmatprep.subr.mxu0 0.0
    %363 = vmatpush1.msra.mxu0 0.0
    %364 = vmatprep.subr.mxu0 0.0
    %365 = vmatpush1.msra.mxu0 0.0
    %366 = vmatprep.subr.mxu0 0.0
    %367 = vmatpush1.msra.mxu0 0.0
    %368 = vmatprep.subr.mxu0 0.0
    %369 = vmatpush1.msra.mxu0 0.0
    %370 = vmatprep.subr.mxu0 0.0
    %371 = vmatpush1.msra.mxu0 0.0
    %372 = vmatprep.subr.mxu0 0.0
    %373 = vmatpush1.msra.mxu0 0.0
    %374 = vmatprep.subr.mxu0 0.0
    %375 = vmatpush1.msra.mxu0 0.0
    %376 = vmatprep.subr.mxu0 0.0
    %377 = vmatpush1.msra.mxu0 0.0
    %378 = vmatprep.subr.mxu0 0.0
    %379 = vmatpush1.msra.mxu0 0.0
    %380 = vmatprep.subr.mxu0 0.0
    %381 = vmatpush1.msra.mxu0 0.0
    %382 = vmatprep.subr.mxu0 0.0
    %383 = vmatpush1.msra.mxu0 0.0
    %384 = vmatprep.subr.mxu0 0.0
    %385 = vmatpush1.msra.mxu0 0.0
    %386 = vmatprep.subr.mxu0 0.0
    %387 = vmatpush1.msra.mxu0 0.0
    %388 = vmatprep.subr.mxu0 0.0
    %389 = vmatpush1.msra.mxu0 0.0
    %390 = vmatprep.mubr.f32.mxu0 0.0
    %391 = vmatmul.mubr.f32.gmra.mrb[0].mxu0 %v300
    %v392 = vpop.f32.mrb[0].mxu0
    %v393 = vadd.f32 %v324, %v392
    %v394 = vpop.f32.mrb[0].mxu0
    %395 = vdwg.mxu0
    %v396 = vld [vmem:[#allocation10] sm:$0xff]
    %v397 = vld [vmem:[#allocation10 + $0x8] sm:$0xff]
    %v398 = vld [vmem:[#allocation10 + $0x10] sm:$0xff]
    %v399 = vld [vmem:[#allocation10 + $0x18] sm:$0xff]
    %v400 = vld [vmem:[#allocation10 + $0x20] sm:$0xff]
    %v401 = vld [vmem:[#allocation10 + $0x28] sm:$0xff]
    %v402 = vld [vmem:[#allocation10 + $0x30] sm:$0xff]
    %v403 = vld [vmem:[#allocation10 + $0x38] sm:$0xff]
    %v404 = vld [vmem:[#allocation10 + $0x40] sm:$0xff]
    %v405 = vld [vmem:[#allocation10 + $0x48] sm:$0xff]
    %v406 = vld [vmem:[#allocation10 + $0x50] sm:$0xff]
    %v407 = vld [vmem:[#allocation10 + $0x58] sm:$0xff]
    %v408 = vld [vmem:[#allocation10 + $0x60] sm:$0xff]
    %v409 = vld [vmem:[#allocation10 + $0x68] sm:$0xff]
    %v410 = vld [vmem:[#allocation10 + $0x70] sm:$0xff]
    %v411 = vld [vmem:[#allocation10 + $0x78] sm:$0xff]
    %v412 = vld [vmem:[%s8] sm:$0x1]
    %v414 = vlaneseq
    %v415 = vshrl.u32 %v414, 7
    %v416 = vsub.s32 0, %v415
    %v417 = vrot.slane %v412, %v416
    %419 = vmatprep.subr.mxu0 0.0
    %420 = vmatpush1.msra.mxu0 %v396
    %421 = vmatprep.subr.mxu0 0.0
    %422 = vmatpush1.msra.mxu0 %v397
    %423 = vmatprep.subr.mxu0 0.0
    %424 = vmatpush1.msra.mxu0 %v398
    %425 = vmatprep.subr.mxu0 0.0
    %426 = vmatpush1.msra.mxu0 %v399
    %427 = vmatprep.subr.mxu0 0.0
    %428 = vmatpush1.msra.mxu0 %v400
    %429 = vmatprep.subr.mxu0 0.0
    %430 = vmatpush1.msra.mxu0 %v401
    %431 = vmatprep.subr.mxu0 0.0
    %432 = vmatpush1.msra.mxu0 %v402
    %433 = vmatprep.subr.mxu0 0.0
    %434 = vmatpush1.msra.mxu0 %v403
    %435 = vmatprep.subr.mxu0 0.0
    %436 = vmatpush1.msra.mxu0 %v404
    %437 = vmatprep.subr.mxu0 0.0
    %438 = vmatpush1.msra.mxu0 %v405
    %439 = vmatprep.subr.mxu0 0.0
    %440 = vmatpush1.msra.mxu0 %v406
    %441 = vmatprep.subr.mxu0 0.0
    %442 = vmatpush1.msra.mxu0 %v407
    %443 = vmatprep.subr.mxu0 0.0
    %444 = vmatpush1.msra.mxu0 %v408
    %445 = vmatprep.subr.mxu0 0.0
    %446 = vmatpush1.msra.mxu0 %v409
    %447 = vmatprep.subr.mxu0 0.0
    %448 = vmatpush1.msra.mxu0 %v410
    %449 = vmatprep.subr.mxu0 0.0
    %450 = vmatpush1.msra.mxu0 %v411
    %451 = vmatprep.subr.mxu0 0.0
    %452 = vmatpush1.msra.mxu0 0.0
    %453 = vmatprep.subr.mxu0 0.0
    %454 = vmatpush1.msra.mxu0 0.0
    %455 = vmatprep.subr.mxu0 0.0
    %456 = vmatpush1.msra.mxu0 0.0
    %457 = vmatprep.subr.mxu0 0.0
    %458 = vmatpush1.msra.mxu0 0.0
    %459 = vmatprep.subr.mxu0 0.0
    %460 = vmatpush1.msra.mxu0 0.0
    %461 = vmatprep.subr.mxu0 0.0
    %462 = vmatpush1.msra.mxu0 0.0
    %463 = vmatprep.subr.mxu0 0.0
    %464 = vmatpush1.msra.mxu0 0.0
    %465 = vmatprep.subr.mxu0 0.0
    %466 = vmatpush1.msra.mxu0 0.0
    %467 = vmatprep.subr.mxu0 0.0
    %468 = vmatpush1.msra.mxu0 0.0
    %469 = vmatprep.subr.mxu0 0.0
    %470 = vmatpush1.msra.mxu0 0.0
    %471 = vmatprep.subr.mxu0 0.0
    %472 = vmatpush1.msra.mxu0 0.0
    %473 = vmatprep.subr.mxu0 0.0
    %474 = vmatpush1.msra.mxu0 0.0
    %475 = vmatprep.subr.mxu0 0.0
    %476 = vmatpush1.msra.mxu0 0.0
    %477 = vmatprep.subr.mxu0 0.0
    %478 = vmatpush1.msra.mxu0 0.0
    %479 = vmatprep.subr.mxu0 0.0
    %480 = vmatpush1.msra.mxu0 0.0
    %481 = vmatprep.subr.mxu0 0.0
    %482 = vmatpush1.msra.mxu0 0.0
    %483 = vmatprep.mubr.f32.mxu0 0.0
    %484 = vmatmul.mubr.f32.gmra.mrb[0].mxu0 %v393
    %v485 = vpop.f32.mrb[0].mxu0
    %v486 = vadd.f32 %v417, %v485
    %v487 = vpop.f32.mrb[0].mxu0
    %488 = vdwg.mxu0
    %489 = vst [vmem:[#allocation11] sm:$0xff] %v486
    // Predicated region
    $region58: #{tpu_custom_call.1} parent=1 // pred_check
      _
    $region59: #{tpu_custom_call.1} parent=1 // pred_check_branch
      %491 = sbr.rel (0) target = $region61
    $region60: #{tpu_custom_call.1} parent=1 // pred_region
      %s493 = ssub.s32 128, 128
      %494 = vsyncadd [#allocation4], %s493
      %s496 = sshll.u32 [#allocation11], 4
      %s497 = int_to_ptr.vmem [resolvable:$true] %s496
      %499 = dma.vmem_to_hbm [thread:$0]  %s497, 128, %s9, [#allocation4]
    $region61: #{tpu_custom_call.1} parent=1 // pred_fallthru
      _
    // Predicated region
    $region62: #{tpu_custom_call.1} parent=1 // pred_check
      _
    $region63: #{tpu_custom_call.1} parent=1 // pred_check_branch
      %501 = sbr.rel (0) target = $region65
    $region64: #{tpu_custom_call.1} parent=1 // pred_region
      %502 = dma.done [#allocation4], 128
    $region65: #{tpu_custom_call.1} parent=1 // pred_fallthru
      _
    %503 = vsyncpa [#allocation3], 1
    %504 = vsyncpa [#allocation6], 1
    %505 = vsyncpa [#allocation9], 1
    %506 = vsyncpa [#allocation4], 1

</llo_original>
